<compile_context>
chip_gen: v6e
topology: v6e:2x2x1
jax: 0.10.0
libtpu: 0.0.40
codegen_flags: <defaults>
</compile_context>

<pallas_src>
import functools

import jax
import jax.numpy as jnp
import numpy as np
from jax.experimental import pallas as pl
from jax.experimental.pallas import tpu as pltpu


def _round_up(a, m):
    return ((a + m - 1) // m) * m


# ----------------------------------------------------------------------------
# Generic Pallas kernel:  for P planes,  out[p] = A @ x[p] @ B   (f32 accumulate)
# ----------------------------------------------------------------------------
def _plane_matmul_kernel(x_ref, a_ref, b_ref, o_ref, *, planes):
    a = a_ref[...]                                   # hoisted out of the plane loop
    b = b_ref[...]
    for p in range(planes):                          # static unroll; P is small
        tmp = jnp.dot(a, x_ref[p], preferred_element_type=jnp.float32)    # (h_out, w)
        o_ref[p] = jnp.dot(tmp.astype(b.dtype), b,
                           preferred_element_type=jnp.float32)            # (h_out, w_out_pad)


def _choose_planes_per_step(num_planes, in_bytes_per_plane, out_bytes_per_plane,
                            budget_bytes=12 * 2**20):
    divisors = [d for d in range(1, num_planes + 1) if num_planes % d == 0]

    def fits(d):
        return 2 * d * (in_bytes_per_plane + out_bytes_per_plane) <= budget_bytes

    preferred = [d for d in divisors if fits(d) and num_planes // d >= 2]
    if preferred:                                    # keep both v7x TCs busy
        return max(preferred)
    fitting = [d for d in divisors if fits(d)]
    return max(fitting) if fitting else 1


def _plane_matmul(x_planes, A, B):
    """x_planes: (P_total, h, w); A: (h_out, h); B: (w, w_out_pad) -> (P_total, h_out, w_out_pad) f32."""
    num_planes, h, w = x_planes.shape
    h_out = A.shape[0]
    w_out_pad = B.shape[1]
    itemsize = x_planes.dtype.itemsize

    planes_per_step = _choose_planes_per_step(
        num_planes, h * w * itemsize, h_out * w_out_pad * 4)
    grid = (num_planes // planes_per_step,)

    flops = 2 * num_planes * (h_out * h * w + h_out * w * w_out_pad)
    bytes_accessed = (num_planes * h * w * itemsize
                      + A.size * A.dtype.itemsize + B.size * B.dtype.itemsize
                      + num_planes * h_out * w_out_pad * 4)
    cost = pl.CostEstimate(flops=int(flops), transcendentals=0,
                           bytes_accessed=int(bytes_accessed))

    # Explicit VMEM budget (double-buffered in/out blocks + A + B + tmp + slack),
    # only raised above the conservative default when actually needed; capped v7x-safe.
    blk_in = planes_per_step * h * w * itemsize
    blk_out = planes_per_step * h_out * w_out_pad * 4
    need = (2 * (blk_in + blk_out)
            + 2 * (A.size * A.dtype.itemsize + B.size * B.dtype.itemsize)
            + planes_per_step * h_out * w * 4 + (1 << 20))
    vmem_limit = int(min(2 * need, 60 * 2**20)) if need > 16 * 2**20 else None

    kernel = functools.partial(_plane_matmul_kernel, planes=planes_per_step)
    return pl.pallas_call(
        kernel,
        out_shape=jax.ShapeDtypeStruct((num_planes, h_out, w_out_pad), jnp.float32),
        grid_spec=pltpu.PrefetchScalarGridSpec(
            num_scalar_prefetch=0,
            grid=grid,
            in_specs=[
                pl.BlockSpec((planes_per_step, h, w), lambda i: (i, 0, 0)),
                pl.BlockSpec((h_out, h), lambda i: (0, 0)),
                pl.BlockSpec((w, w_out_pad), lambda i: (0, 0)),
            ],
            out_specs=pl.BlockSpec((planes_per_step, h_out, w_out_pad),
                                   lambda i: (i, 0, 0)),
        ),
        compiler_params=pltpu.CompilerParams(
            dimension_semantics=("parallel",),
            vmem_limit_bytes=vmem_limit,
        ),
        cost_estimate=cost,
    )(x_planes, A, B)


# ----------------------------------------------------------------------------
# IDLoss.face_pool: AdaptiveAvgPool2d -> (112, 112), via the plane-matmul kernel
# ----------------------------------------------------------------------------
def _adaptive_pool_matrices(h, w, out_h=112, out_w=112):
    def axis_matrix(in_n, out_n):
        M = np.zeros((out_n, in_n), dtype=np.float32)
        for i in range(out_n):
            s = (i * in_n) // out_n
            e = -((-(i + 1) * in_n) // out_n)   # ceil
            M[i, s:e] = 1.0 / (e - s)
        return M

    A = axis_matrix(h, out_h)                        # (out_h, h)
    Bw = axis_matrix(w, out_w)                       # (out_w, w)
    out_w_pad = _round_up(out_w, 128)
    B = np.zeros((w, out_w_pad), dtype=np.float32)   # lane-dense output block
    B[:, :out_w] = Bw.T
    return jnp.asarray(A), jnp.asarray(B), out_h, out_w


def face_pool_112(x_nchw, compute_dtype=jnp.float32):
    n, c, h, w = x_nchw.shape
    A, B, oh, ow = _adaptive_pool_matrices(h, w)
    xp = x_nchw.reshape(n * c, h, w).astype(compute_dtype)
    out = _plane_matmul(xp, A.astype(compute_dtype), B.astype(compute_dtype))
    return out[:, :, :ow].reshape(n, c, oh, ow)


# ----------------------------------------------------------------------------
# IDLoss reduction: mean_i (1 - dot(feats_hat[i], feats[i]))
# ----------------------------------------------------------------------------
def _id_loss_kernel(fh_ref, f_ref, o_ref):
    n = fh_ref.shape[0]
    prod = fh_ref[...].astype(jnp.float32) * f_ref[...].astype(jnp.float32)   # (N, D)
    row = jnp.sum(prod, axis=1, keepdims=True)                                # (N, 1)
    tot = jnp.sum(row, axis=0, keepdims=True)                                 # (1, 1)
    o_ref[...] = 1.0 - tot / n


def id_loss_from_feats(y_hat_feats, y_feats):
    """feats: (N, D). Returns scalar mean_i(1 - <y_hat_feats[i], y_feats[i]>)."""
    out = pl.pallas_call(
        _id_loss_kernel,
        out_shape=jax.ShapeDtypeStruct((1, 1), jnp.float32),
    )(y_hat_feats, y_feats)
    return out[0, 0]


def id_loss_forward(y_hat, y, facenet_fn, compute_dtype=jnp.float32):
    """Mirrors IDLoss.forward: pool -> facenet -> averaged (1 - dot). facenet_fn is pluggable."""
    # .detach() on y_feats only affects autodiff; forward value is identical.
    y_feats = jax.lax.stop_gradient(facenet_fn(face_pool_112(y, compute_dtype)))
    y_hat_feats = facenet_fn(face_pool_112(y_hat, compute_dtype))
    return id_loss_from_feats(y_hat_feats, y_feats)


# ----------------------------------------------------------------------------
# Pure-JAX / numpy references and a stand-in embedder for the composite demo
# ----------------------------------------------------------------------------
def _adaptive_pool_reference(x, out_h=112, out_w=112):
    xn = np.asarray(x, dtype=np.float32)
    n, c, h, w = xn.shape
    out = np.zeros((n, c, out_h, out_w), np.float32)
    for i in range(out_h):
        hs, he = (i * h) // out_h, -((-(i + 1) * h) // out_h)
        for j in range(out_w):
            ws, we = (j * w) // out_w, -((-(j + 1) * w) // out_w)
            out[:, :, i, j] = xn[:, :, hs:he, ws:we].mean(axis=(2, 3))
    return out


def _standin_facenet(proj):
    # TODO(synk): stands in for the untranslatable pretrained ArcFace IR-SE-50 backbone;
    # used only to exercise the composed forward path end to end.
    def fn(imgs_nchw):
        feats = jnp.mean(imgs_nchw, axis=-1).reshape(imgs_nchw.shape[0], -1) @ proj
        return feats / jnp.linalg.norm(feats, axis=-1, keepdims=True)
    return fn


def _id_loss_forward_reference(y_hat, y, facenet_fn):
    fh = facenet_fn(jnp.asarray(_adaptive_pool_reference(y_hat)))
    ff = facenet_fn(jnp.asarray(_adaptive_pool_reference(y)))
    return jnp.mean(1.0 - jnp.sum(fh * ff, axis=-1))


if __name__ == "__main__":
    key = jax.random.PRNGKey(0)
    k1, k2, k3, k4, k5 = jax.random.split(key, 5)

    # --- IDLoss.face_pool (AdaptiveAvgPool2d -> 112x112) via the plane-matmul kernel ---
    y = jax.random.uniform(k1, (2, 3, 16, 16), dtype=jnp.float32)
    pooled = jax.block_until_ready(face_pool_112(y))
    pref = jnp.asarray(_adaptive_pool_reference(y))
    assert pooled.shape == (2, 3, 112, 112), pooled.shape
    assert jnp.allclose(pooled, pref, atol=1e-5, rtol=1e-5), \
        float(jnp.max(jnp.abs(pooled - pref)))

    # bf16 compute path (halves the HBM-bound input stream on v6e/v7x)
    pooled_bf16 = jax.block_until_ready(face_pool_112(y, compute_dtype=jnp.bfloat16))
    assert float(jnp.max(jnp.abs(pooled_bf16 - pref))) < 0.05

    # --- IDLoss reduction over (unit-norm, ArcFace-like) embeddings ---
    # TODO(synk): real embeddings come from the untranslatable pretrained facenet;
    # synthetic unit vectors are used only to exercise the loss kernel.
    fh = jax.random.normal(k2, (2, 512), dtype=jnp.float32)
    ff = jax.random.normal(k3, (2, 512), dtype=jnp.float32)
    fh = fh / jnp.linalg.norm(fh, axis=-1, keepdims=True)
    ff = ff / jnp.linalg.norm(ff, axis=-1, keepdims=True)
    loss = jax.block_until_ready(id_loss_from_feats(fh, ff))
    loss_ref = jnp.mean(1.0 - jnp.sum(fh * ff, axis=-1))
    assert abs(float(loss) - float(loss_ref)) < 1e-5, (float(loss), float(loss_ref))

    # --- full forward composition (pool -> embed -> loss) with the stand-in embedder ---
    y_hat = jax.random.uniform(k4, (2, 3, 16, 16), dtype=jnp.float32)
    proj = jax.random.normal(k5, (3 * 112, 512), dtype=jnp.float32)
    facenet_fn = _standin_facenet(proj)
    total = jax.block_until_ready(id_loss_forward(y_hat, y, facenet_fn))
    total_ref = _id_loss_forward_reference(y_hat, y, facenet_fn)
    assert abs(float(total) - float(total_ref)) < 1e-4, (float(total), float(total_ref))

    print("KERNEL_OK")
</pallas_src>

<mosaic_0001>
module attributes {stable_mosaic.version = 11 : i64} {
  func.func @_plane_matmul_kernel(%arg0: i32, %arg1: memref<3x16x16xf32, #tpu.memory_space<vmem>>, %arg2: memref<112x16xf32, #tpu.memory_space<vmem>>, %arg3: memref<16x128xf32, #tpu.memory_space<vmem>>, %arg4: memref<3x112x128xf32, #tpu.memory_space<vmem>>) attributes {dimension_semantics = [#tpu.dimension_semantics<parallel>], iteration_bounds = array<i64: 2>, scalar_prefetch = 0 : i64, scratch_operands = 0 : i64, tpu.core_type = #tpu.core_type<tc>, window_params = [{transform_indices = @transform_0, window_bounds = array<i64: 3, 16, 16>}, {pipeline_mode = #tpu.pipeline_mode<synchronous>, transform_indices = @transform_1, window_bounds = array<i64: 112, 16>}, {pipeline_mode = #tpu.pipeline_mode<synchronous>, transform_indices = @transform_2, window_bounds = array<i64: 16, 128>}, {transform_indices = @transform_3, window_bounds = array<i64: 3, 112, 128>}]} {
    %c0 = arith.constant 0 : index
    %c0_0 = arith.constant 0 : index
    %0 = vector.load %arg2[%c0, %c0_0] : memref<112x16xf32, #tpu.memory_space<vmem>>, vector<112x16xf32>
    %c0_1 = arith.constant 0 : index
    %c0_2 = arith.constant 0 : index
    %1 = vector.load %arg3[%c0_1, %c0_2] : memref<16x128xf32, #tpu.memory_space<vmem>>, vector<16x128xf32>
    %c0_3 = arith.constant 0 : index
    %c0_4 = arith.constant 0 : index
    %c0_5 = arith.constant 0 : index
    %2 = vector.load %arg1[%c0_3, %c0_4, %c0_5] : memref<3x16x16xf32, #tpu.memory_space<vmem>>, vector<1x16x16xf32>
    %3 = vector.shape_cast %2 : vector<1x16x16xf32> to vector<16x16xf32>
    %cst = arith.constant dense<0.000000e+00> : vector<112x16xf32>
    %4 = tpu.matmul %0, %3, %cst {dimension_numbers = #tpu.dot_dimension_numbers<[1], [0], [0], [1], [0, 0, 1, 1], [], []>} : vector<112x16xf32>, vector<16x16xf32>, vector<112x16xf32> -> vector<112x16xf32>
    %cst_6 = arith.constant dense<0.000000e+00> : vector<112x128xf32>
    %5 = tpu.matmul %4, %1, %cst_6 {dimension_numbers = #tpu.dot_dimension_numbers<[1], [0], [0], [1], [0, 0, 1, 1], [], []>} : vector<112x16xf32>, vector<16x128xf32>, vector<112x128xf32> -> vector<112x128xf32>
    %c0_7 = arith.constant 0 : index
    %c0_8 = arith.constant 0 : index
    %c0_9 = arith.constant 0 : index
    %6 = vector.load %arg4[%c0_7, %c0_8, %c0_9] : memref<3x112x128xf32, #tpu.memory_space<vmem>>, vector<1x112x128xf32>
    %7 = vector.shape_cast %6 : vector<1x112x128xf32> to vector<112x128xf32>
    %8 = vector.shape_cast %5 : vector<112x128xf32> to vector<1x112x128xf32>
    tpu.vector_store %arg4[%c0_7, %c0_8, %c0_9], %8 {strides = array<i32>} : memref<3x112x128xf32, #tpu.memory_space<vmem>>, vector<1x112x128xf32>,
    %c1 = arith.constant 1 : index
    %c0_10 = arith.constant 0 : index
    %c0_11 = arith.constant 0 : index
    %9 = vector.load %arg1[%c1, %c0_10, %c0_11] : memref<3x16x16xf32, #tpu.memory_space<vmem>>, vector<1x16x16xf32>
    %10 = vector.shape_cast %9 : vector<1x16x16xf32> to vector<16x16xf32>
    %cst_12 = arith.constant dense<0.000000e+00> : vector<112x16xf32>
    %11 = tpu.matmul %0, %10, %cst_12 {dimension_numbers = #tpu.dot_dimension_numbers<[1], [0], [0], [1], [0, 0, 1, 1], [], []>} : vector<112x16xf32>, vector<16x16xf32>, vector<112x16xf32> -> vector<112x16xf32>
    %cst_13 = arith.constant dense<0.000000e+00> : vector<112x128xf32>
    %12 = tpu.matmul %11, %1, %cst_13 {dimension_numbers = #tpu.dot_dimension_numbers<[1], [0], [0], [1], [0, 0, 1, 1], [], []>} : vector<112x16xf32>, vector<16x128xf32>, vector<112x128xf32> -> vector<112x128xf32>
    %c1_14 = arith.constant 1 : index
    %c0_15 = arith.constant 0 : index
    %c0_16 = arith.constant 0 : index
    %13 = vector.load %arg4[%c1_14, %c0_15, %c0_16] : memref<3x112x128xf32, #tpu.memory_space<vmem>>, vector<1x112x128xf32>
    %14 = vector.shape_cast %13 : vector<1x112x128xf32> to vector<112x128xf32>
    %15 = vector.shape_cast %12 : vector<112x128xf32> to vector<1x112x128xf32>
    tpu.vector_store %arg4[%c1_14, %c0_15, %c0_16], %15 {strides = array<i32>} : memref<3x112x128xf32, #tpu.memory_space<vmem>>, vector<1x112x128xf32>,
    %c2 = arith.constant 2 : index
    %c0_17 = arith.constant 0 : index
    %c0_18 = arith.constant 0 : index
    %16 = vector.load %arg1[%c2, %c0_17, %c0_18] : memref<3x16x16xf32, #tpu.memory_space<vmem>>, vector<1x16x16xf32>
    %17 = vector.shape_cast %16 : vector<1x16x16xf32> to vector<16x16xf32>
    %cst_19 = arith.constant dense<0.000000e+00> : vector<112x16xf32>
    %18 = tpu.matmul %0, %17, %cst_19 {dimension_numbers = #tpu.dot_dimension_numbers<[1], [0], [0], [1], [0, 0, 1, 1], [], []>} : vector<112x16xf32>, vector<16x16xf32>, vector<112x16xf32> -> vector<112x16xf32>
    %cst_20 = arith.constant dense<0.000000e+00> : vector<112x128xf32>
    %19 = tpu.matmul %18, %1, %cst_20 {dimension_numbers = #tpu.dot_dimension_numbers<[1], [0], [0], [1], [0, 0, 1, 1], [], []>} : vector<112x16xf32>, vector<16x128xf32>, vector<112x128xf32> -> vector<112x128xf32>
    %c2_21 = arith.constant 2 : index
    %c0_22 = arith.constant 0 : index
    %c0_23 = arith.constant 0 : index
    %20 = vector.load %arg4[%c2_21, %c0_22, %c0_23] : memref<3x112x128xf32, #tpu.memory_space<vmem>>, vector<1x112x128xf32>
    %21 = vector.shape_cast %20 : vector<1x112x128xf32> to vector<112x128xf32>
    %22 = vector.shape_cast %19 : vector<112x128xf32> to vector<1x112x128xf32>
    tpu.vector_store %arg4[%c2_21, %c0_22, %c0_23], %22 {strides = array<i32>} : memref<3x112x128xf32, #tpu.memory_space<vmem>>, vector<1x112x128xf32>,
    return
  }
  func.func @transform_0(%arg0: i32) -> (i32, i32, i32) {
    %c0_i32 = arith.constant 0 : i32
    %c0_i32_0 = arith.constant 0 : i32
    %c0_i32_1 = arith.constant 0 : i32
    return %arg0, %c0_i32, %c0_i32_0 : i32, i32, i32
  }
  func.func @transform_1(%arg0: i32) -> (i32, i32) {
    %c0_i32 = arith.constant 0 : i32
    %c0_i32_0 = arith.constant 0 : i32
    %c0_i32_1 = arith.constant 0 : i32
    return %c0_i32, %c0_i32_0 : i32, i32
  }
  func.func @transform_2(%arg0: i32) -> (i32, i32) {
    %c0_i32 = arith.constant 0 : i32
    %c0_i32_0 = arith.constant 0 : i32
    %c0_i32_1 = arith.constant 0 : i32
    return %c0_i32, %c0_i32_0 : i32, i32
  }
  func.func @transform_3(%arg0: i32) -> (i32, i32, i32) {
    %c0_i32 = arith.constant 0 : i32
    %c0_i32_0 = arith.constant 0 : i32
    %c0_i32_1 = arith.constant 0 : i32
    return %arg0, %c0_i32, %c0_i32_0 : i32, i32, i32
  }
}

</mosaic_0001>

<llo_original>
// kernel: tpu_custom_call.1
$region0: #{tpu_custom_call.1}
  #allocation0 [shape = 'u32[]', space=smem, size = 0x4, offset = 0x4, fixed_abs, tag = 'smem constant byte address 0x4 - core index']
  #allocation1 [shape = 'u32[144,128]{1,0:T(1,128)}', space=vmem, size = 0x12000, scoped, tag = 'internal scratch']
  %s0 = inlined_call_operand.vmem [shape: f32[6,16,16], index: 0, kind: input, shape index: {}]
  %s1 = inlined_call_operand.vmem [shape: f32[112,16], index: 1, kind: input, shape index: {}]
  %s2 = inlined_call_operand.vmem [shape: f32[16,128], index: 2, kind: input, shape index: {}]
  %s3 = inlined_call_operand.hbm [shape: f32[6,112,128], index: 3, kind: output, shape index: {}]
  %s4 = sld [smem:[#allocation0]]
  $region45: #{tpu_custom_call.1} parent=0
    _
  %s6 = ssub.s32 1, %s4
  %s7 = scalar_select 0, %s6, %s4
  $region1: #{tpu_custom_call.1} parent=0
    #allocation2 [shape = 'u8[344064]{0}', space=vmem, size = 0x54000, scoped, tag = 'output window, operand 0']
    #allocation3 [shape = 's32[2]{0}', space=sflag, size = 0x8, scoped, tag = 'scoped memory for tpu_custom_call.1']
    %8 = vsyncpa [#allocation3], 0
    %s9 = scalar_lea.sflag [#allocation3], 1
    %10 = vsyncpa %s9, 0
    loop: start=0, step=1, limit=4
    $region2: #{tpu_custom_call.1} parent=1 // loop_pre_header
      _
    $region3: #{tpu_custom_call.1} parent=1 // loop_header
      %s12 = sphi 0, %s16
      %p13 = scmp.ge.s32.totalorder %s12, 4
      %s22 = sphi 0, %s24
      %s25 = sphi 0, %s22
      %s26 = sphi 0, %s25
      %s42 = sphi 0, %s26
      %s46 = sphi 0, %s46
      %s48 = sphi 0, %s46
      %s49 = sphi 0, %s48
      %s63 = sphi 0, %s49
      %s67 = sphi 0, %s67
      %s69 = sphi 0, %s67
      %s70 = sphi 0, %s69
      %s84 = sphi 0, %s70
      %s90 = sphi 0, %s92
      %s93 = sphi 0, %s90
      %s94 = sphi 0, %s93
      %s110 = sphi 0, %s94
    $region4: #{tpu_custom_call.1} parent=1 // loop_header_branch
      %15 = sbr.rel (%p13) target = $region8
    $region5: #{tpu_custom_call.1} parent=1 // loop_body
      %s17 = ssub.s32 %s12, 1
      %s18 = ssub.s32 %s12, 2
      %s19 = sadd.s32 %s12, 1
      %s20 = ssub.s32 %s12, %s19
      %p21 = scmp.eq.s32.totalorder %s20, 0
      %s23 = sadd.s32 %s22, 1
      %s24 = scalar_select %p21, %s22, %s23
      %p27 = pneg %p21
      %p28 = scmp.eq.s32.totalorder %s12, 1
      %p29 = por %p27, %p28
      %p30 = scmp.ne.s32.totalorder %s22, %s25
      %p31 = scmp.eq.s32.totalorder %s12, 0
      %p32 = por %p30, %p31
      %p33 = scmp.ne.s32.totalorder %s22, %s25
      %p34 = scmp.eq.s32.totalorder %s17, 1
      %p35 = por %p33, %p34
      %p36 = scmp.ne.s32.totalorder %s25, %s26
      %p37 = scmp.eq.s32.totalorder %s17, 0
      %p38 = por %p36, %p37
      %p39 = scmp.ne.s32.totalorder %s25, %s26
      %p40 = scmp.eq.s32.totalorder %s18, 1
      %p41 = por %p39, %p40
      %p43 = scmp.ne.s32.totalorder %s26, %s42
      %p44 = scmp.eq.s32.totalorder %s18, 0
      %p45 = por %p43, %p44
      %s47 = sadd.s32 %s46, 1
      %p50 = scmp.eq.s32.totalorder %s12, 1
      %p51 = scmp.ne.s32.totalorder %s46, %s48
      %p52 = scmp.eq.s32.totalorder %s12, 0
      %p53 = por %p51, %p52
      %p54 = scmp.ne.s32.totalorder %s46, %s48
      %p55 = scmp.eq.s32.totalorder %s17, 1
      %p56 = por %p54, %p55
      %p57 = scmp.ne.s32.totalorder %s48, %s49
      %p58 = scmp.eq.s32.totalorder %s17, 0
      %p59 = por %p57, %p58
      %p60 = scmp.ne.s32.totalorder %s48, %s49
      %p61 = scmp.eq.s32.totalorder %s18, 1
      %p62 = por %p60, %p61
      %p64 = scmp.ne.s32.totalorder %s49, %s63
      %p65 = scmp.eq.s32.totalorder %s18, 0
      %p66 = por %p64, %p65
      %s68 = sadd.s32 %s67, 1
      %p71 = scmp.eq.s32.totalorder %s12, 1
      %p72 = scmp.ne.s32.totalorder %s67, %s69
      %p73 = scmp.eq.s32.totalorder %s12, 0
      %p74 = por %p72, %p73
      %p75 = scmp.ne.s32.totalorder %s67, %s69
      %p76 = scmp.eq.s32.totalorder %s17, 1
      %p77 = por %p75, %p76
      %p78 = scmp.ne.s32.totalorder %s69, %s70
      %p79 = scmp.eq.s32.totalorder %s17, 0
      %p80 = por %p78, %p79
      %p81 = scmp.ne.s32.totalorder %s69, %s70
      %p82 = scmp.eq.s32.totalorder %s18, 1
      %p83 = por %p81, %p82
      %p85 = scmp.ne.s32.totalorder %s70, %s84
      %p86 = scmp.eq.s32.totalorder %s18, 0
      %p87 = por %p85, %p86
      %s88 = ssub.s32 %s12, %s19
      %p89 = scmp.eq.s32.totalorder %s88, 0
      %s91 = sadd.s32 %s90, 1
      %s92 = scalar_select %p89, %s90, %s91
      %p95 = pneg %p89
      %p96 = scmp.eq.s32.totalorder %s12, 1
      %p97 = por %p95, %p96
      %p98 = scmp.ne.s32.totalorder %s90, %s93
      %p99 = scmp.eq.s32.totalorder %s12, 0
      %p100 = por %p98, %p99
      %p101 = scmp.ne.s32.totalorder %s90, %s93
      %p102 = scmp.eq.s32.totalorder %s17, 1
      %p103 = por %p101, %p102
      %p104 = scmp.ne.s32.totalorder %s93, %s94
      %p105 = scmp.eq.s32.totalorder %s17, 0
      %p106 = por %p104, %p105
      %p107 = scmp.ne.s32.totalorder %s93, %s94
      %p108 = scmp.eq.s32.totalorder %s18, 1
      %p109 = por %p107, %p108
      %p111 = scmp.ne.s32.totalorder %s94, %s110
      %p112 = scmp.eq.s32.totalorder %s18, 0
      %p113 = por %p111, %p112
      %p114 = scmp.le.s32.totalorder 1, %s12
      %p115 = scmp.lt.s32.totalorder %s12, 3
      %p116 = pnand %p114, %p115
      %p117 = pneg %p116
      // Predicated region
      $region9: #{tpu_custom_call.1} parent=5 // pred_check
        _
      $region10: #{tpu_custom_call.1} parent=5 // pred_check_branch
        %119 = sbr.rel (%p116) target = $region12
      $region11: #{tpu_custom_call.1} parent=5 // pred_region
        %s120 = ssub.s32 %s12, 1
        // Predicated region
        $region13: #{tpu_custom_call.1} parent=11 // pred_check
          %p121 = pneg %p59
        $region14: #{tpu_custom_call.1} parent=11 // pred_check_branch
          %123 = sbr.rel (%p121) target = $region16
        $region15: #{tpu_custom_call.1} parent=11 // pred_region
          _
        $region16: #{tpu_custom_call.1} parent=11 // pred_fallthru
          _
        // Predicated region
        $region17: #{tpu_custom_call.1} parent=11 // pred_check
          %p124 = pneg %p80
        $region18: #{tpu_custom_call.1} parent=11 // pred_check_branch
          %126 = sbr.rel (%p124) target = $region20
        $region19: #{tpu_custom_call.1} parent=11 // pred_region
          _
        $region20: #{tpu_custom_call.1} parent=11 // pred_fallthru
          _
      $region12: #{tpu_custom_call.1} parent=5 // pred_fallthru
        _
      %p127 = scmp.lt.s32.totalorder %s12, 2
      // Predicated region
      $region21: #{tpu_custom_call.1} parent=5 // pred_check
        %p128 = pneg %p127
      $region22: #{tpu_custom_call.1} parent=5 // pred_check_branch
        %130 = sbr.rel (%p128) target = $region24
      $region23: #{tpu_custom_call.1} parent=5 // pred_region
        // Predicated region
        $region25: #{tpu_custom_call.1} parent=23 // pred_check
          %p131 = pneg %p32
        $region26: #{tpu_custom_call.1} parent=23 // pred_check_branch
          %133 = sbr.rel (%p131) target = $region28
        $region27: #{tpu_custom_call.1} parent=23 // pred_region
          %s134 = smul.u32 3, %s12
          %p135 = scmp.lt.s32.totalorder %s134, 5
          %s136 = scalar_select %p135, %s134, 5
          %s137 = smul.addr %s136, 2
          %s138 = smul.addr %s137, 8
          %s139 = scalar_lea.vmem %s0, %s138
          %s140 = smul.u32 3, %s12
        $region28: #{tpu_custom_call.1} parent=23 // pred_fallthru
          _
      $region24: #{tpu_custom_call.1} parent=5 // pred_fallthru
        _
      %p141 = scmp.le.s32.totalorder 1, %s12
      %p142 = scmp.lt.s32.totalorder %s12, 3
      %p143 = pnand %p141, %p142
      %p144 = pneg %p143
      // Predicated region
      $region29: #{tpu_custom_call.1} parent=5 // pred_check
        _
      $region30: #{tpu_custom_call.1} parent=5 // pred_check_branch
        %146 = sbr.rel (%p143) target = $region32
      $region31: #{tpu_custom_call.1} parent=5 // pred_region
        %s147 = ssub.s32 %s12, 1
        %s148 = smul.u32 3, %s17
        %p149 = scmp.lt.s32.totalorder %s148, 5
        %s150 = scalar_select %p149, %s148, 5
        %s151 = smul.addr %s150, 2
        %s152 = smul.addr %s151, 8
        %s153 = scalar_lea.vmem %s0, %s152
        %p154 = pneg %p38
        %p155 = pneg %p35
        %p156 = pneg %p59
        %p157 = pneg %p56
        %p158 = pneg %p80
        %p159 = pneg %p77
        %p160 = pneg %p106
        %p161 = pneg %p103
        %s162 = sand.u32 %s93, 1
        %s163 = scalar_lea.sflag [#allocation3], %s162
        %s164 = sand.u32 %s93, 1
        %s165 = smul.addr %s164, 336
        %s166 = scalar_lea.vmem [#allocation2], %s165
        %s167 = smul.u32 3, %s17
        %p168 = scmp.lt.s32.totalorder %s167, 5
        %s169 = scalar_select %p168, %s167, 5
        %s170 = smul.addr %s169, 2
        %s171 = smul.addr %s170, 8
        %s172 = scalar_lea.vmem %s0, %s171
        %s173 = smul.u32 3, %s17
        %s174 = smul.u32 3, %s17
        %v175 = vld [vmem:[%s1] sm:$0xff]
        %v176 = vld [vmem:[%s1 + $0x8] sm:$0xff]
        %v177 = vld [vmem:[%s1 + $0x10] sm:$0xff]
        %v178 = vld [vmem:[%s1 + $0x18] sm:$0xff]
        %v179 = vld [vmem:[%s1 + $0x20] sm:$0xff]
        %v180 = vld [vmem:[%s1 + $0x28] sm:$0xff]
        %v181 = vld [vmem:[%s1 + $0x30] sm:$0xff]
        %v182 = vld [vmem:[%s1 + $0x38] sm:$0xff]
        %v183 = vld [vmem:[%s1 + $0x40] sm:$0xff]
        %v184 = vld [vmem:[%s1 + $0x48] sm:$0xff]
        %v185 = vld [vmem:[%s1 + $0x50] sm:$0xff]
        %v186 = vld [vmem:[%s1 + $0x58] sm:$0xff]
        %v187 = vld [vmem:[%s1 + $0x60] sm:$0xff]
        %v188 = vld [vmem:[%s1 + $0x68] sm:$0xff]
        %v189 = vld [vmem:[%s2] sm:$0xff]
        %v190 = vld [vmem:[%s2 + $0x8] sm:$0xff]
        %v191 = vld [vmem:[%s172] sm:$0xff]
        %v192 = vld [vmem:[%s172 + $0x8] sm:$0xff]
        %vm193 = vcmask 130048
        %v195 = vsel %vm193, %v175, 0
        %v198 = vsel %vm193, %v176, 0
        %v201 = vsel %vm193, %v177, 0
        %v204 = vsel %vm193, %v178, 0
        %v207 = vsel %vm193, %v179, 0
        %v210 = vsel %vm193, %v180, 0
        %v213 = vsel %vm193, %v181, 0
        %v216 = vsel %vm193, %v182, 0
        %v219 = vsel %vm193, %v183, 0
        %v222 = vsel %vm193, %v184, 0
        %v225 = vsel %vm193, %v185, 0
        %v228 = vsel %vm193, %v186, 0
        %v231 = vsel %vm193, %v187, 0
        %v234 = vsel %vm193, %v188, 0
        %236 = vmatprep.subr.mxu0 0.0
        %237 = vmatpush1.msra.mxu0 0.0
        %238 = vmatprep.subr.mxu0 0.0
        %239 = vmatpush1.msra.mxu0 0.0
        %240 = vmatprep.subr.mxu0 0.0
        %241 = vmatpush1.msra.mxu0 0.0
        %242 = vmatprep.subr.mxu0 0.0
        %243 = vmatpush1.msra.mxu0 0.0
        %244 = vmatprep.subr.mxu0 0.0
        %245 = vmatpush1.msra.mxu0 0.0
        %246 = vmatprep.subr.mxu0 0.0
        %247 = vmatpush1.msra.mxu0 0.0
        %248 = vmatprep.subr.mxu0 0.0
        %249 = vmatpush1.msra.mxu0 0.0
        %250 = vmatprep.subr.mxu0 0.0
        %251 = vmatpush1.msra.mxu0 0.0
        %252 = vmatprep.subr.mxu0 0.0
        %253 = vmatpush1.msra.mxu0 0.0
        %254 = vmatprep.subr.mxu0 0.0
        %255 = vmatpush1.msra.mxu0 0.0
        %256 = vmatprep.subr.mxu0 0.0
        %257 = vmatpush1.msra.mxu0 0.0
        %258 = vmatprep.subr.mxu0 0.0
        %259 = vmatpush1.msra.mxu0 0.0
        %260 = vmatprep.subr.mxu0 0.0
        %261 = vmatpush1.msra.mxu0 0.0
        %262 = vmatprep.subr.mxu0 0.0
        %263 = vmatpush1.msra.mxu0 0.0
        %264 = vmatprep.subr.mxu0 0.0
        %265 = vmatpush1.msra.mxu0 %v192
        %266 = vmatprep.subr.mxu0 0.0
        %267 = vmatpush1.msra.mxu0 %v191
        %268 = vmatprep.subr.mxu0 0.0
        %269 = vmatpush2.msra.mxu0 0.0
        %270 = vmatprep.subr.mxu0 0.0
        %271 = vmatpush2.msra.mxu0 0.0
        %272 = vmatprep.subr.mxu0 0.0
        %273 = vmatpush2.msra.mxu0 0.0
        %274 = vmatprep.subr.mxu0 0.0
        %275 = vmatpush2.msra.mxu0 0.0
        %276 = vmatprep.subr.mxu0 0.0
        %277 = vmatpush2.msra.mxu0 0.0
        %278 = vmatprep.subr.mxu0 0.0
        %279 = vmatpush2.msra.mxu0 0.0
        %280 = vmatprep.subr.mxu0 0.0
        %281 = vmatpush2.msra.mxu0 0.0
        %282 = vmatprep.subr.mxu0 0.0
        %283 = vmatpush2.msra.mxu0 0.0
        %284 = vmatprep.subr.mxu0 0.0
        %285 = vmatpush2.msra.mxu0 0.0
        %286 = vmatprep.subr.mxu0 0.0
        %287 = vmatpush2.msra.mxu0 0.0
        %288 = vmatprep.subr.mxu0 0.0
        %289 = vmatpush2.msra.mxu0 0.0
        %290 = vmatprep.subr.mxu0 0.0
        %291 = vmatpush2.msra.mxu0 0.0
        %292 = vmatprep.subr.mxu0 0.0
        %293 = vmatpush2.msra.mxu0 0.0
        %294 = vmatprep.subr.mxu0 0.0
        %295 = vmatpush2.msra.mxu0 0.0
        %296 = vmatprep.subr.mxu0 0.0
        %297 = vmatpush2.msra.mxu0 0.0
        %298 = vmatprep.subr.mxu0 0.0
        %299 = vmatpush2.msra.mxu0 0.0
        %300 = vmatprep.mubr.f32.mxu0 0.0
        %301 = vmatmul.mubr.f32.gmra.mxu0 %v195
        %v302 = vpop.f32.mrf.mxu0
        %v303 = vadd.f32 0.0, %v302
        %v304 = vpop.f32.mrf.mxu0
        %305 = vmatprep.mubr.f32.mxu0 0.0
        %306 = vmatmul.mubr.f32.gmra.mxu0 %v198
        %v307 = vpop.f32.mrf.mxu0
        %v308 = vadd.f32 0.0, %v307
        %v309 = vpop.f32.mrf.mxu0
        %310 = vmatprep.mubr.f32.mxu0 0.0
        %311 = vmatmul.mubr.f32.gmra.mxu0 %v201
        %v312 = vpop.f32.mrf.mxu0
        %v313 = vadd.f32 0.0, %v312
        %v314 = vpop.f32.mrf.mxu0
        %315 = vmatprep.mubr.f32.mxu0 0.0
        %316 = vmatmul.mubr.f32.gmra.mxu0 %v204
        %v317 = vpop.f32.mrf.mxu0
        %v318 = vadd.f32 0.0, %v317
        %v319 = vpop.f32.mrf.mxu0
        %320 = vmatprep.mubr.f32.mxu0 0.0
        %321 = vmatmul.mubr.f32.gmra.mxu0 %v207
        %v322 = vpop.f32.mrf.mxu0
        %v323 = vadd.f32 0.0, %v322
        %v324 = vpop.f32.mrf.mxu0
        %325 = vmatprep.mubr.f32.mxu0 0.0
        %326 = vmatmul.mubr.f32.gmra.mxu0 %v210
        %v327 = vpop.f32.mrf.mxu0
        %v328 = vadd.f32 0.0, %v327
        %v329 = vpop.f32.mrf.mxu0
        %330 = vmatprep.mubr.f32.mxu0 0.0
        %331 = vmatmul.mubr.f32.gmra.mxu0 %v213
        %v332 = vpop.f32.mrf.mxu0
        %v333 = vadd.f32 0.0, %v332
        %v334 = vpop.f32.mrf.mxu0
        %335 = vmatprep.mubr.f32.mxu0 0.0
        %336 = vmatmul.mubr.f32.gmra.mxu0 %v216
        %v337 = vpop.f32.mrf.mxu0
        %v338 = vadd.f32 0.0, %v337
        %v339 = vpop.f32.mrf.mxu0
        %340 = vmatprep.mubr.f32.mxu0 0.0
        %341 = vmatmul.mubr.f32.gmra.mxu0 %v219
        %v342 = vpop.f32.mrf.mxu0
        %v343 = vadd.f32 0.0, %v342
        %v344 = vpop.f32.mrf.mxu0
        %345 = vmatprep.mubr.f32.mxu0 0.0
        %346 = vmatmul.mubr.f32.gmra.mxu0 %v222
        %v347 = vpop.f32.mrf.mxu0
        %v348 = vadd.f32 0.0, %v347
        %v349 = vpop.f32.mrf.mxu0
        %350 = vmatprep.mubr.f32.mxu0 0.0
        %351 = vmatmul.mubr.f32.gmra.mxu0 %v225
        %v352 = vpop.f32.mrf.mxu0
        %v353 = vadd.f32 0.0, %v352
        %v354 = vpop.f32.mrf.mxu0
        %355 = vmatprep.mubr.f32.mxu0 0.0
        %356 = vmatmul.mubr.f32.gmra.mxu0 %v228
        %v357 = vpop.f32.mrf.mxu0
        %v358 = vadd.f32 0.0, %v357
        %v359 = vpop.f32.mrf.mxu0
        %360 = vmatprep.mubr.f32.mxu0 0.0
        %361 = vmatmul.mubr.f32.gmra.mxu0 %v231
        %v362 = vpop.f32.mrf.mxu0
        %v363 = vadd.f32 0.0, %v362
        %v364 = vpop.f32.mrf.mxu0
        %365 = vmatprep.mubr.f32.mxu0 0.0
        %366 = vmatmul.mubr.f32.gmra.mxu0 %v234
        %v367 = vpop.f32.mrf.mxu0
        %v368 = vadd.f32 0.0, %v367
        %v369 = vpop.f32.mrf.mxu0
        %370 = vdwg.mxu0
        %v372 = vsel %vm193, %v303, 0
        %v375 = vsel %vm193, %v308, 0
        %v378 = vsel %vm193, %v313, 0
        %v381 = vsel %vm193, %v318, 0
        %v384 = vsel %vm193, %v323, 0
        %v387 = vsel %vm193, %v328, 0
        %v390 = vsel %vm193, %v333, 0
        %v393 = vsel %vm193, %v338, 0
        %v396 = vsel %vm193, %v343, 0
        %v399 = vsel %vm193, %v348, 0
        %v402 = vsel %vm193, %v353, 0
        %v405 = vsel %vm193, %v358, 0
        %v408 = vsel %vm193, %v363, 0
        %v411 = vsel %vm193, %v368, 0
        %413 = vmatprep.subr.mxu0 0.0
        %414 = vmatpush1.msra.mxu0 0.0
        %415 = vmatprep.subr.mxu0 0.0
        %416 = vmatpush1.msra.mxu0 0.0
        %417 = vmatprep.subr.mxu0 0.0
        %418 = vmatpush1.msra.mxu0 0.0
        %419 = vmatprep.subr.mxu0 0.0
        %420 = vmatpush1.msra.mxu0 0.0
        %421 = vmatprep.subr.mxu0 0.0
        %422 = vmatpush1.msra.mxu0 0.0
        %423 = vmatprep.subr.mxu0 0.0
        %424 = vmatpush1.msra.mxu0 0.0
        %425 = vmatprep.subr.mxu0 0.0
        %426 = vmatpush1.msra.mxu0 0.0
        %427 = vmatprep.subr.mxu0 0.0
        %428 = vmatpush1.msra.mxu0 0.0
        %429 = vmatprep.subr.mxu0 0.0
        %430 = vmatpush1.msra.mxu0 0.0
        %431 = vmatprep.subr.mxu0 0.0
        %432 = vmatpush1.msra.mxu0 0.0
        %433 = vmatprep.subr.mxu0 0.0
        %434 = vmatpush1.msra.mxu0 0.0
        %435 = vmatprep.subr.mxu0 0.0
        %436 = vmatpush1.msra.mxu0 0.0
        %437 = vmatprep.subr.mxu0 0.0
        %438 = vmatpush1.msra.mxu0 0.0
        %439 = vmatprep.subr.mxu0 0.0
        %440 = vmatpush1.msra.mxu0 0.0
        %441 = vmatprep.subr.mxu0 0.0
        %442 = vmatpush1.msra.mxu0 %v190
        %443 = vmatprep.subr.mxu0 0.0
        %444 = vmatpush1.msra.mxu0 %v189
        %445 = vmatprep.subr.mxu0 0.0
        %446 = vmatpush2.msra.mxu0 0.0
        %447 = vmatprep.subr.mxu0 0.0
        %448 = vmatpush2.msra.mxu0 0.0
        %449 = vmatprep.subr.mxu0 0.0
        %450 = vmatpush2.msra.mxu0 0.0
        %451 = vmatprep.subr.mxu0 0.0
        %452 = vmatpush2.msra.mxu0 0.0
        %453 = vmatprep.subr.mxu0 0.0
        %454 = vmatpush2.msra.mxu0 0.0
        %455 = vmatprep.subr.mxu0 0.0
        %456 = vmatpush2.msra.mxu0 0.0
        %457 = vmatprep.subr.mxu0 0.0
        %458 = vmatpush2.msra.mxu0 0.0
        %459 = vmatprep.subr.mxu0 0.0
        %460 = vmatpush2.msra.mxu0 0.0
        %461 = vmatprep.subr.mxu0 0.0
        %462 = vmatpush2.msra.mxu0 0.0
        %463 = vmatprep.subr.mxu0 0.0
        %464 = vmatpush2.msra.mxu0 0.0
        %465 = vmatprep.subr.mxu0 0.0
        %466 = vmatpush2.msra.mxu0 0.0
        %467 = vmatprep.subr.mxu0 0.0
        %468 = vmatpush2.msra.mxu0 0.0
        %469 = vmatprep.subr.mxu0 0.0
        %470 = vmatpush2.msra.mxu0 0.0
        %471 = vmatprep.subr.mxu0 0.0
        %472 = vmatpush2.msra.mxu0 0.0
        %473 = vmatprep.subr.mxu0 0.0
        %474 = vmatpush2.msra.mxu0 0.0
        %475 = vmatprep.subr.mxu0 0.0
        %476 = vmatpush2.msra.mxu0 0.0
        %477 = vmatprep.mubr.f32.mxu0 0.0
        %478 = vmatmul.mubr.f32.gmra.mxu0 %v372
        %v479 = vpop.f32.mrf.mxu0
        %v480 = vadd.f32 0.0, %v479
        %v481 = vpop.f32.mrf.mxu0
        %482 = vmatprep.mubr.f32.mxu0 0.0
        %483 = vmatmul.mubr.f32.gmra.mxu0 %v375
        %v484 = vpop.f32.mrf.mxu0
        %v485 = vadd.f32 0.0, %v484
        %v486 = vpop.f32.mrf.mxu0
        %487 = vmatprep.mubr.f32.mxu0 0.0
        %488 = vmatmul.mubr.f32.gmra.mxu0 %v378
        %v489 = vpop.f32.mrf.mxu0
        %v490 = vadd.f32 0.0, %v489
        %v491 = vpop.f32.mrf.mxu0
        %492 = vmatprep.mubr.f32.mxu0 0.0
        %493 = vmatmul.mubr.f32.gmra.mxu0 %v381
        %v494 = vpop.f32.mrf.mxu0
        %v495 = vadd.f32 0.0, %v494
        %v496 = vpop.f32.mrf.mxu0
        %497 = vmatprep.mubr.f32.mxu0 0.0
        %498 = vmatmul.mubr.f32.gmra.mxu0 %v384
        %v499 = vpop.f32.mrf.mxu0
        %v500 = vadd.f32 0.0, %v499
        %v501 = vpop.f32.mrf.mxu0
        %502 = vmatprep.mubr.f32.mxu0 0.0
        %503 = vmatmul.mubr.f32.gmra.mxu0 %v387
        %v504 = vpop.f32.mrf.mxu0
        %v505 = vadd.f32 0.0, %v504
        %v506 = vpop.f32.mrf.mxu0
        %507 = vmatprep.mubr.f32.mxu0 0.0
        %508 = vmatmul.mubr.f32.gmra.mxu0 %v390
        %v509 = vpop.f32.mrf.mxu0
        %v510 = vadd.f32 0.0, %v509
        %v511 = vpop.f32.mrf.mxu0
        %512 = vmatprep.mubr.f32.mxu0 0.0
        %513 = vmatmul.mubr.f32.gmra.mxu0 %v393
        %v514 = vpop.f32.mrf.mxu0
        %v515 = vadd.f32 0.0, %v514
        %v516 = vpop.f32.mrf.mxu0
        %517 = vmatprep.mubr.f32.mxu0 0.0
        %518 = vmatmul.mubr.f32.gmra.mxu0 %v396
        %v519 = vpop.f32.mrf.mxu0
        %v520 = vadd.f32 0.0, %v519
        %v521 = vpop.f32.mrf.mxu0
        %522 = vmatprep.mubr.f32.mxu0 0.0
        %523 = vmatmul.mubr.f32.gmra.mxu0 %v399
        %v524 = vpop.f32.mrf.mxu0
        %v525 = vadd.f32 0.0, %v524
        %v526 = vpop.f32.mrf.mxu0
        %527 = vmatprep.mubr.f32.mxu0 0.0
        %528 = vmatmul.mubr.f32.gmra.mxu0 %v402
        %v529 = vpop.f32.mrf.mxu0
        %v530 = vadd.f32 0.0, %v529
        %v531 = vpop.f32.mrf.mxu0
        %532 = vmatprep.mubr.f32.mxu0 0.0
        %533 = vmatmul.mubr.f32.gmra.mxu0 %v405
        %v534 = vpop.f32.mrf.mxu0
        %v535 = vadd.f32 0.0, %v534
        %v536 = vpop.f32.mrf.mxu0
        %537 = vmatprep.mubr.f32.mxu0 0.0
        %538 = vmatmul.mubr.f32.gmra.mxu0 %v408
        %v539 = vpop.f32.mrf.mxu0
        %v540 = vadd.f32 0.0, %v539
        %v541 = vpop.f32.mrf.mxu0
        %542 = vmatprep.mubr.f32.mxu0 0.0
        %543 = vmatmul.mubr.f32.gmra.mxu0 %v411
        %v544 = vpop.f32.mrf.mxu0
        %v545 = vadd.f32 0.0, %v544
        %v546 = vpop.f32.mrf.mxu0
        %547 = vdwg.mxu0
        %548 = vst [vmem:[%s166] sm:$0xff] %v480
        %549 = vst [vmem:[%s166 + $0x8] sm:$0xff] %v485
        %550 = vst [vmem:[%s166 + $0x10] sm:$0xff] %v490
        %551 = vst [vmem:[%s166 + $0x18] sm:$0xff] %v495
        %552 = vst [vmem:[%s166 + $0x20] sm:$0xff] %v500
        %553 = vst [vmem:[%s166 + $0x28] sm:$0xff] %v505
        %554 = vst [vmem:[%s166 + $0x30] sm:$0xff] %v510
        %555 = vst [vmem:[%s166 + $0x38] sm:$0xff] %v515
        %556 = vst [vmem:[%s166 + $0x40] sm:$0xff] %v520
        %557 = vst [vmem:[%s166 + $0x48] sm:$0xff] %v525
        %558 = vst [vmem:[%s166 + $0x50] sm:$0xff] %v530
        %559 = vst [vmem:[%s166 + $0x58] sm:$0xff] %v535
        %560 = vst [vmem:[%s166 + $0x60] sm:$0xff] %v540
        %561 = vst [vmem:[%s166 + $0x68] sm:$0xff] %v545
        %s562 = scalar_lea.vmem %s172, 16
        %v563 = vld [vmem:[%s562] sm:$0xff]
        %v564 = vld [vmem:[%s562 + $0x8] sm:$0xff]
        %565 = vmatprep.subr.mxu0 0.0
        %566 = vmatpush1.msra.mxu0 0.0
        %567 = vmatprep.subr.mxu0 0.0
        %568 = vmatpush1.msra.mxu0 0.0
        %569 = vmatprep.subr.mxu0 0.0
        %570 = vmatpush1.msra.mxu0 0.0
        %571 = vmatprep.subr.mxu0 0.0
        %572 = vmatpush1.msra.mxu0 0.0
        %573 = vmatprep.subr.mxu0 0.0
        %574 = vmatpush1.msra.mxu0 0.0
        %575 = vmatprep.subr.mxu0 0.0
        %576 = vmatpush1.msra.mxu0 0.0
        %577 = vmatprep.subr.mxu0 0.0
        %578 = vmatpush1.msra.mxu0 0.0
        %579 = vmatprep.subr.mxu0 0.0
        %580 = vmatpush1.msra.mxu0 0.0
        %581 = vmatprep.subr.mxu0 0.0
        %582 = vmatpush1.msra.mxu0 0.0
        %583 = vmatprep.subr.mxu0 0.0
        %584 = vmatpush1.msra.mxu0 0.0
        %585 = vmatprep.subr.mxu0 0.0
        %586 = vmatpush1.msra.mxu0 0.0
        %587 = vmatprep.subr.mxu0 0.0
        %588 = vmatpush1.msra.mxu0 0.0
        %589 = vmatprep.subr.mxu0 0.0
        %590 = vmatpush1.msra.mxu0 0.0
        %591 = vmatprep.subr.mxu0 0.0
        %592 = vmatpush1.msra.mxu0 0.0
        %593 = vmatprep.subr.mxu0 0.0
        %594 = vmatpush1.msra.mxu0 %v564
        %595 = vmatprep.subr.mxu0 0.0
        %596 = vmatpush1.msra.mxu0 %v563
        %597 = vmatprep.subr.mxu0 0.0
        %598 = vmatpush2.msra.mxu0 0.0
        %599 = vmatprep.subr.mxu0 0.0
        %600 = vmatpush2.msra.mxu0 0.0
        %601 = vmatprep.subr.mxu0 0.0
        %602 = vmatpush2.msra.mxu0 0.0
        %603 = vmatprep.subr.mxu0 0.0
        %604 = vmatpush2.msra.mxu0 0.0
        %605 = vmatprep.subr.mxu0 0.0
        %606 = vmatpush2.msra.mxu0 0.0
        %607 = vmatprep.subr.mxu0 0.0
        %608 = vmatpush2.msra.mxu0 0.0
        %609 = vmatprep.subr.mxu0 0.0
        %610 = vmatpush2.msra.mxu0 0.0
        %611 = vmatprep.subr.mxu0 0.0
        %612 = vmatpush2.msra.mxu0 0.0
        %613 = vmatprep.subr.mxu0 0.0
        %614 = vmatpush2.msra.mxu0 0.0
        %615 = vmatprep.subr.mxu0 0.0
        %616 = vmatpush2.msra.mxu0 0.0
        %617 = vmatprep.subr.mxu0 0.0
        %618 = vmatpush2.msra.mxu0 0.0
        %619 = vmatprep.subr.mxu0 0.0
        %620 = vmatpush2.msra.mxu0 0.0
        %621 = vmatprep.subr.mxu0 0.0
        %622 = vmatpush2.msra.mxu0 0.0
        %623 = vmatprep.subr.mxu0 0.0
        %624 = vmatpush2.msra.mxu0 0.0
        %625 = vmatprep.subr.mxu0 0.0
        %626 = vmatpush2.msra.mxu0 0.0
        %627 = vmatprep.subr.mxu0 0.0
        %628 = vmatpush2.msra.mxu0 0.0
        %629 = vmatprep.mubr.f32.mxu0 0.0
        %630 = vmatmul.mubr.f32.gmra.mxu0 %v195
        %v631 = vpop.f32.mrf.mxu0
        %v632 = vadd.f32 0.0, %v631
        %v633 = vpop.f32.mrf.mxu0
        %634 = vmatprep.mubr.f32.mxu0 0.0
        %635 = vmatmul.mubr.f32.gmra.mxu0 %v198
        %v636 = vpop.f32.mrf.mxu0
        %v637 = vadd.f32 0.0, %v636
        %v638 = vpop.f32.mrf.mxu0
        %639 = vmatprep.mubr.f32.mxu0 0.0
        %640 = vmatmul.mubr.f32.gmra.mxu0 %v201
        %v641 = vpop.f32.mrf.mxu0
        %v642 = vadd.f32 0.0, %v641
        %v643 = vpop.f32.mrf.mxu0
        %644 = vmatprep.mubr.f32.mxu0 0.0
        %645 = vmatmul.mubr.f32.gmra.mxu0 %v204
        %v646 = vpop.f32.mrf.mxu0
        %v647 = vadd.f32 0.0, %v646
        %v648 = vpop.f32.mrf.mxu0
        %649 = vmatprep.mubr.f32.mxu0 0.0
        %650 = vmatmul.mubr.f32.gmra.mxu0 %v207
        %v651 = vpop.f32.mrf.mxu0
        %v652 = vadd.f32 0.0, %v651
        %v653 = vpop.f32.mrf.mxu0
        %654 = vmatprep.mubr.f32.mxu0 0.0
        %655 = vmatmul.mubr.f32.gmra.mxu0 %v210
        %v656 = vpop.f32.mrf.mxu0
        %v657 = vadd.f32 0.0, %v656
        %v658 = vpop.f32.mrf.mxu0
        %659 = vmatprep.mubr.f32.mxu0 0.0
        %660 = vmatmul.mubr.f32.gmra.mxu0 %v213
        %v661 = vpop.f32.mrf.mxu0
        %v662 = vadd.f32 0.0, %v661
        %v663 = vpop.f32.mrf.mxu0
        %664 = vmatprep.mubr.f32.mxu0 0.0
        %665 = vmatmul.mubr.f32.gmra.mxu0 %v216
        %v666 = vpop.f32.mrf.mxu0
        %v667 = vadd.f32 0.0, %v666
        %v668 = vpop.f32.mrf.mxu0
        %669 = vmatprep.mubr.f32.mxu0 0.0
        %670 = vmatmul.mubr.f32.gmra.mxu0 %v219
        %v671 = vpop.f32.mrf.mxu0
        %v672 = vadd.f32 0.0, %v671
        %v673 = vpop.f32.mrf.mxu0
        %674 = vmatprep.mubr.f32.mxu0 0.0
        %675 = vmatmul.mubr.f32.gmra.mxu0 %v222
        %v676 = vpop.f32.mrf.mxu0
        %v677 = vadd.f32 0.0, %v676
        %v678 = vpop.f32.mrf.mxu0
        %679 = vmatprep.mubr.f32.mxu0 0.0
        %680 = vmatmul.mubr.f32.gmra.mxu0 %v225
        %v681 = vpop.f32.mrf.mxu0
        %v682 = vadd.f32 0.0, %v681
        %v683 = vpop.f32.mrf.mxu0
        %684 = vmatprep.mubr.f32.mxu0 0.0
        %685 = vmatmul.mubr.f32.gmra.mxu0 %v228
        %v686 = vpop.f32.mrf.mxu0
        %v687 = vadd.f32 0.0, %v686
        %v688 = vpop.f32.mrf.mxu0
        %689 = vmatprep.mubr.f32.mxu0 0.0
        %690 = vmatmul.mubr.f32.gmra.mxu0 %v231
        %v691 = vpop.f32.mrf.mxu0
        %v692 = vadd.f32 0.0, %v691
        %v693 = vpop.f32.mrf.mxu0
        %694 = vmatprep.mubr.f32.mxu0 0.0
        %695 = vmatmul.mubr.f32.gmra.mxu0 %v234
        %v696 = vpop.f32.mrf.mxu0
        %v697 = vadd.f32 0.0, %v696
        %v698 = vpop.f32.mrf.mxu0
        %699 = vdwg.mxu0
        %v701 = vsel %vm193, %v632, 0
        %v704 = vsel %vm193, %v637, 0
        %v707 = vsel %vm193, %v642, 0
        %v710 = vsel %vm193, %v647, 0
        %v713 = vsel %vm193, %v652, 0
        %v716 = vsel %vm193, %v657, 0
        %v719 = vsel %vm193, %v662, 0
        %v722 = vsel %vm193, %v667, 0
        %v725 = vsel %vm193, %v672, 0
        %v728 = vsel %vm193, %v677, 0
        %v731 = vsel %vm193, %v682, 0
        %v734 = vsel %vm193, %v687, 0
        %v737 = vsel %vm193, %v692, 0
        %v740 = vsel %vm193, %v697, 0
        %742 = vmatprep.subr.mxu0 0.0
        %743 = vmatpush1.msra.mxu0 0.0
        %744 = vmatprep.subr.mxu0 0.0
        %745 = vmatpush1.msra.mxu0 0.0
        %746 = vmatprep.subr.mxu0 0.0
        %747 = vmatpush1.msra.mxu0 0.0
        %748 = vmatprep.subr.mxu0 0.0
        %749 = vmatpush1.msra.mxu0 0.0
        %750 = vmatprep.subr.mxu0 0.0
        %751 = vmatpush1.msra.mxu0 0.0
        %752 = vmatprep.subr.mxu0 0.0
        %753 = vmatpush1.msra.mxu0 0.0
        %754 = vmatprep.subr.mxu0 0.0
        %755 = vmatpush1.msra.mxu0 0.0
        %756 = vmatprep.subr.mxu0 0.0
        %757 = vmatpush1.msra.mxu0 0.0
        %758 = vmatprep.subr.mxu0 0.0
        %759 = vmatpush1.msra.mxu0 0.0
        %760 = vmatprep.subr.mxu0 0.0
        %761 = vmatpush1.msra.mxu0 0.0
        %762 = vmatprep.subr.mxu0 0.0
        %763 = vmatpush1.msra.mxu0 0.0
        %764 = vmatprep.subr.mxu0 0.0
        %765 = vmatpush1.msra.mxu0 0.0
        %766 = vmatprep.subr.mxu0 0.0
        %767 = vmatpush1.msra.mxu0 0.0
        %768 = vmatprep.subr.mxu0 0.0
        %769 = vmatpush1.msra.mxu0 0.0
        %770 = vmatprep.subr.mxu0 0.0
        %771 = vmatpush1.msra.mxu0 %v190
        %772 = vmatprep.subr.mxu0 0.0
        %773 = vmatpush1.msra.mxu0 %v189
        %774 = vmatprep.subr.mxu0 0.0
        %775 = vmatpush2.msra.mxu0 0.0
        %776 = vmatprep.subr.mxu0 0.0
        %777 = vmatpush2.msra.mxu0 0.0
        %778 = vmatprep.subr.mxu0 0.0
        %779 = vmatpush2.msra.mxu0 0.0
        %780 = vmatprep.subr.mxu0 0.0
        %781 = vmatpush2.msra.mxu0 0.0
        %782 = vmatprep.subr.mxu0 0.0
        %783 = vmatpush2.msra.mxu0 0.0
        %784 = vmatprep.subr.mxu0 0.0
        %785 = vmatpush2.msra.mxu0 0.0
        %786 = vmatprep.subr.mxu0 0.0
        %787 = vmatpush2.msra.mxu0 0.0
        %788 = vmatprep.subr.mxu0 0.0
        %789 = vmatpush2.msra.mxu0 0.0
        %790 = vmatprep.subr.mxu0 0.0
        %791 = vmatpush2.msra.mxu0 0.0
        %792 = vmatprep.subr.mxu0 0.0
        %793 = vmatpush2.msra.mxu0 0.0
        %794 = vmatprep.subr.mxu0 0.0
        %795 = vmatpush2.msra.mxu0 0.0
        %796 = vmatprep.subr.mxu0 0.0
        %797 = vmatpush2.msra.mxu0 0.0
        %798 = vmatprep.subr.mxu0 0.0
        %799 = vmatpush2.msra.mxu0 0.0
        %800 = vmatprep.subr.mxu0 0.0
        %801 = vmatpush2.msra.mxu0 0.0
        %802 = vmatprep.subr.mxu0 0.0
        %803 = vmatpush2.msra.mxu0 0.0
        %804 = vmatprep.subr.mxu0 0.0
        %805 = vmatpush2.msra.mxu0 0.0
        %806 = vmatprep.mubr.f32.mxu0 0.0
        %807 = vmatmul.mubr.f32.gmra.mxu0 %v701
        %v808 = vpop.f32.mrf.mxu0
        %v809 = vadd.f32 0.0, %v808
        %v810 = vpop.f32.mrf.mxu0
        %811 = vmatprep.mubr.f32.mxu0 0.0
        %812 = vmatmul.mubr.f32.gmra.mxu0 %v704
        %v813 = vpop.f32.mrf.mxu0
        %v814 = vadd.f32 0.0, %v813
        %v815 = vpop.f32.mrf.mxu0
        %816 = vmatprep.mubr.f32.mxu0 0.0
        %817 = vmatmul.mubr.f32.gmra.mxu0 %v707
        %v818 = vpop.f32.mrf.mxu0
        %v819 = vadd.f32 0.0, %v818
        %v820 = vpop.f32.mrf.mxu0
        %821 = vmatprep.mubr.f32.mxu0 0.0
        %822 = vmatmul.mubr.f32.gmra.mxu0 %v710
        %v823 = vpop.f32.mrf.mxu0
        %v824 = vadd.f32 0.0, %v823
        %v825 = vpop.f32.mrf.mxu0
        %826 = vmatprep.mubr.f32.mxu0 0.0
        %827 = vmatmul.mubr.f32.gmra.mxu0 %v713
        %v828 = vpop.f32.mrf.mxu0
        %v829 = vadd.f32 0.0, %v828
        %v830 = vpop.f32.mrf.mxu0
        %831 = vmatprep.mubr.f32.mxu0 0.0
        %832 = vmatmul.mubr.f32.gmra.mxu0 %v716
        %v833 = vpop.f32.mrf.mxu0
        %v834 = vadd.f32 0.0, %v833
        %v835 = vpop.f32.mrf.mxu0
        %836 = vmatprep.mubr.f32.mxu0 0.0
        %837 = vmatmul.mubr.f32.gmra.mxu0 %v719
        %v838 = vpop.f32.mrf.mxu0
        %v839 = vadd.f32 0.0, %v838
        %v840 = vpop.f32.mrf.mxu0
        %841 = vmatprep.mubr.f32.mxu0 0.0
        %842 = vmatmul.mubr.f32.gmra.mxu0 %v722
        %v843 = vpop.f32.mrf.mxu0
        %v844 = vadd.f32 0.0, %v843
        %v845 = vpop.f32.mrf.mxu0
        %846 = vmatprep.mubr.f32.mxu0 0.0
        %847 = vmatmul.mubr.f32.gmra.mxu0 %v725
        %v848 = vpop.f32.mrf.mxu0
        %v849 = vadd.f32 0.0, %v848
        %v850 = vpop.f32.mrf.mxu0
        %851 = vmatprep.mubr.f32.mxu0 0.0
        %852 = vmatmul.mubr.f32.gmra.mxu0 %v728
        %v853 = vpop.f32.mrf.mxu0
        %v854 = vadd.f32 0.0, %v853
        %v855 = vpop.f32.mrf.mxu0
        %856 = vmatprep.mubr.f32.mxu0 0.0
        %857 = vmatmul.mubr.f32.gmra.mxu0 %v731
        %v858 = vpop.f32.mrf.mxu0
        %v859 = vadd.f32 0.0, %v858
        %v860 = vpop.f32.mrf.mxu0
        %861 = vmatprep.mubr.f32.mxu0 0.0
        %862 = vmatmul.mubr.f32.gmra.mxu0 %v734
        %v863 = vpop.f32.mrf.mxu0
        %v864 = vadd.f32 0.0, %v863
        %v865 = vpop.f32.mrf.mxu0
        %866 = vmatprep.mubr.f32.mxu0 0.0
        %867 = vmatmul.mubr.f32.gmra.mxu0 %v737
        %v868 = vpop.f32.mrf.mxu0
        %v869 = vadd.f32 0.0, %v868
        %v870 = vpop.f32.mrf.mxu0
        %871 = vmatprep.mubr.f32.mxu0 0.0
        %872 = vmatmul.mubr.f32.gmra.mxu0 %v740
        %v873 = vpop.f32.mrf.mxu0
        %v874 = vadd.f32 0.0, %v873
        %v875 = vpop.f32.mrf.mxu0
        %876 = vdwg.mxu0
        %s877 = scalar_lea.vmem %s166, 112 [#allocation2]
        %878 = vst [vmem:[%s877] sm:$0xff] %v809
        %879 = vst [vmem:[%s877 + $0x8] sm:$0xff] %v814
        %880 = vst [vmem:[%s877 + $0x10] sm:$0xff] %v819
        %881 = vst [vmem:[%s877 + $0x18] sm:$0xff] %v824
        %882 = vst [vmem:[%s877 + $0x20] sm:$0xff] %v829
        %883 = vst [vmem:[%s877 + $0x28] sm:$0xff] %v834
        %884 = vst [vmem:[%s877 + $0x30] sm:$0xff] %v839
        %885 = vst [vmem:[%s877 + $0x38] sm:$0xff] %v844
        %886 = vst [vmem:[%s877 + $0x40] sm:$0xff] %v849
        %887 = vst [vmem:[%s877 + $0x48] sm:$0xff] %v854
        %888 = vst [vmem:[%s877 + $0x50] sm:$0xff] %v859
        %889 = vst [vmem:[%s877 + $0x58] sm:$0xff] %v864
        %890 = vst [vmem:[%s877 + $0x60] sm:$0xff] %v869
        %891 = vst [vmem:[%s877 + $0x68] sm:$0xff] %v874
        %s892 = scalar_lea.vmem %s172, 32
        %v893 = vld [vmem:[%s892] sm:$0xff]
        %v894 = vld [vmem:[%s892 + $0x8] sm:$0xff]
        %895 = vmatprep.subr.mxu0 0.0
        %896 = vmatpush1.msra.mxu0 0.0
        %897 = vmatprep.subr.mxu0 0.0
        %898 = vmatpush1.msra.mxu0 0.0
        %899 = vmatprep.subr.mxu0 0.0
        %900 = vmatpush1.msra.mxu0 0.0
        %901 = vmatprep.subr.mxu0 0.0
        %902 = vmatpush1.msra.mxu0 0.0
        %903 = vmatprep.subr.mxu0 0.0
        %904 = vmatpush1.msra.mxu0 0.0
        %905 = vmatprep.subr.mxu0 0.0
        %906 = vmatpush1.msra.mxu0 0.0
        %907 = vmatprep.subr.mxu0 0.0
        %908 = vmatpush1.msra.mxu0 0.0
        %909 = vmatprep.subr.mxu0 0.0
        %910 = vmatpush1.msra.mxu0 0.0
        %911 = vmatprep.subr.mxu0 0.0
        %912 = vmatpush1.msra.mxu0 0.0
        %913 = vmatprep.subr.mxu0 0.0
        %914 = vmatpush1.msra.mxu0 0.0
        %915 = vmatprep.subr.mxu0 0.0
        %916 = vmatpush1.msra.mxu0 0.0
        %917 = vmatprep.subr.mxu0 0.0
        %918 = vmatpush1.msra.mxu0 0.0
        %919 = vmatprep.subr.mxu0 0.0
        %920 = vmatpush1.msra.mxu0 0.0
        %921 = vmatprep.subr.mxu0 0.0
        %922 = vmatpush1.msra.mxu0 0.0
        %923 = vmatprep.subr.mxu0 0.0
        %924 = vmatpush1.msra.mxu0 %v894
        %925 = vmatprep.subr.mxu0 0.0
        %926 = vmatpush1.msra.mxu0 %v893
        %927 = vmatprep.subr.mxu0 0.0
        %928 = vmatpush2.msra.mxu0 0.0
        %929 = vmatprep.subr.mxu0 0.0
        %930 = vmatpush2.msra.mxu0 0.0
        %931 = vmatprep.subr.mxu0 0.0
        %932 = vmatpush2.msra.mxu0 0.0
        %933 = vmatprep.subr.mxu0 0.0
        %934 = vmatpush2.msra.mxu0 0.0
        %935 = vmatprep.subr.mxu0 0.0
        %936 = vmatpush2.msra.mxu0 0.0
        %937 = vmatprep.subr.mxu0 0.0
        %938 = vmatpush2.msra.mxu0 0.0
        %939 = vmatprep.subr.mxu0 0.0
        %940 = vmatpush2.msra.mxu0 0.0
        %941 = vmatprep.subr.mxu0 0.0
        %942 = vmatpush2.msra.mxu0 0.0
        %943 = vmatprep.subr.mxu0 0.0
        %944 = vmatpush2.msra.mxu0 0.0
        %945 = vmatprep.subr.mxu0 0.0
        %946 = vmatpush2.msra.mxu0 0.0
        %947 = vmatprep.subr.mxu0 0.0
        %948 = vmatpush2.msra.mxu0 0.0
        %949 = vmatprep.subr.mxu0 0.0
        %950 = vmatpush2.msra.mxu0 0.0
        %951 = vmatprep.subr.mxu0 0.0
        %952 = vmatpush2.msra.mxu0 0.0
        %953 = vmatprep.subr.mxu0 0.0
        %954 = vmatpush2.msra.mxu0 0.0
        %955 = vmatprep.subr.mxu0 0.0
        %956 = vmatpush2.msra.mxu0 0.0
        %957 = vmatprep.subr.mxu0 0.0
        %958 = vmatpush2.msra.mxu0 0.0
        %959 = vmatprep.mubr.f32.mxu0 0.0
        %960 = vmatmul.mubr.f32.gmra.mxu0 %v195
        %v961 = vpop.f32.mrf.mxu0
        %v962 = vadd.f32 0.0, %v961
        %v963 = vpop.f32.mrf.mxu0
        %964 = vmatprep.mubr.f32.mxu0 0.0
        %965 = vmatmul.mubr.f32.gmra.mxu0 %v198
        %v966 = vpop.f32.mrf.mxu0
        %v967 = vadd.f32 0.0, %v966
        %v968 = vpop.f32.mrf.mxu0
        %969 = vmatprep.mubr.f32.mxu0 0.0
        %970 = vmatmul.mubr.f32.gmra.mxu0 %v201
        %v971 = vpop.f32.mrf.mxu0
        %v972 = vadd.f32 0.0, %v971
        %v973 = vpop.f32.mrf.mxu0
        %974 = vmatprep.mubr.f32.mxu0 0.0
        %975 = vmatmul.mubr.f32.gmra.mxu0 %v204
        %v976 = vpop.f32.mrf.mxu0
        %v977 = vadd.f32 0.0, %v976
        %v978 = vpop.f32.mrf.mxu0
        %979 = vmatprep.mubr.f32.mxu0 0.0
        %980 = vmatmul.mubr.f32.gmra.mxu0 %v207
        %v981 = vpop.f32.mrf.mxu0
        %v982 = vadd.f32 0.0, %v981
        %v983 = vpop.f32.mrf.mxu0
        %984 = vmatprep.mubr.f32.mxu0 0.0
        %985 = vmatmul.mubr.f32.gmra.mxu0 %v210
        %v986 = vpop.f32.mrf.mxu0
        %v987 = vadd.f32 0.0, %v986
        %v988 = vpop.f32.mrf.mxu0
        %989 = vmatprep.mubr.f32.mxu0 0.0
        %990 = vmatmul.mubr.f32.gmra.mxu0 %v213
        %v991 = vpop.f32.mrf.mxu0
        %v992 = vadd.f32 0.0, %v991
        %v993 = vpop.f32.mrf.mxu0
        %994 = vmatprep.mubr.f32.mxu0 0.0
        %995 = vmatmul.mubr.f32.gmra.mxu0 %v216
        %v996 = vpop.f32.mrf.mxu0
        %v997 = vadd.f32 0.0, %v996
        %v998 = vpop.f32.mrf.mxu0
        %999 = vmatprep.mubr.f32.mxu0 0.0
        %1000 = vmatmul.mubr.f32.gmra.mxu0 %v219
        %v1001 = vpop.f32.mrf.mxu0
        %v1002 = vadd.f32 0.0, %v1001
        %v1003 = vpop.f32.mrf.mxu0
        %1004 = vmatprep.mubr.f32.mxu0 0.0
        %1005 = vmatmul.mubr.f32.gmra.mxu0 %v222
        %v1006 = vpop.f32.mrf.mxu0
        %v1007 = vadd.f32 0.0, %v1006
        %v1008 = vpop.f32.mrf.mxu0
        %1009 = vmatprep.mubr.f32.mxu0 0.0
        %1010 = vmatmul.mubr.f32.gmra.mxu0 %v225
        %v1011 = vpop.f32.mrf.mxu0
        %v1012 = vadd.f32 0.0, %v1011
        %v1013 = vpop.f32.mrf.mxu0
        %1014 = vmatprep.mubr.f32.mxu0 0.0
        %1015 = vmatmul.mubr.f32.gmra.mxu0 %v228
        %v1016 = vpop.f32.mrf.mxu0
        %v1017 = vadd.f32 0.0, %v1016
        %v1018 = vpop.f32.mrf.mxu0
        %1019 = vmatprep.mubr.f32.mxu0 0.0
        %1020 = vmatmul.mubr.f32.gmra.mxu0 %v231
        %v1021 = vpop.f32.mrf.mxu0
        %v1022 = vadd.f32 0.0, %v1021
        %v1023 = vpop.f32.mrf.mxu0
        %1024 = vmatprep.mubr.f32.mxu0 0.0
        %1025 = vmatmul.mubr.f32.gmra.mxu0 %v234
        %v1026 = vpop.f32.mrf.mxu0
        %v1027 = vadd.f32 0.0, %v1026
        %v1028 = vpop.f32.mrf.mxu0
        %1029 = vdwg.mxu0
        %v1031 = vsel %vm193, %v962, 0
        %v1034 = vsel %vm193, %v967, 0
        %v1037 = vsel %vm193, %v972, 0
        %v1040 = vsel %vm193, %v977, 0
        %v1043 = vsel %vm193, %v982, 0
        %v1046 = vsel %vm193, %v987, 0
        %v1049 = vsel %vm193, %v992, 0
        %v1052 = vsel %vm193, %v997, 0
        %v1055 = vsel %vm193, %v1002, 0
        %v1058 = vsel %vm193, %v1007, 0
        %v1061 = vsel %vm193, %v1012, 0
        %v1064 = vsel %vm193, %v1017, 0
        %v1067 = vsel %vm193, %v1022, 0
        %v1070 = vsel %vm193, %v1027, 0
        %1072 = vmatprep.subr.mxu0 0.0
        %1073 = vmatpush1.msra.mxu0 0.0
        %1074 = vmatprep.subr.mxu0 0.0
        %1075 = vmatpush1.msra.mxu0 0.0
        %1076 = vmatprep.subr.mxu0 0.0
        %1077 = vmatpush1.msra.mxu0 0.0
        %1078 = vmatprep.subr.mxu0 0.0
        %1079 = vmatpush1.msra.mxu0 0.0
        %1080 = vmatprep.subr.mxu0 0.0
        %1081 = vmatpush1.msra.mxu0 0.0
        %1082 = vmatprep.subr.mxu0 0.0
        %1083 = vmatpush1.msra.mxu0 0.0
        %1084 = vmatprep.subr.mxu0 0.0
        %1085 = vmatpush1.msra.mxu0 0.0
        %1086 = vmatprep.subr.mxu0 0.0
        %1087 = vmatpush1.msra.mxu0 0.0
        %1088 = vmatprep.subr.mxu0 0.0
        %1089 = vmatpush1.msra.mxu0 0.0
        %1090 = vmatprep.subr.mxu0 0.0
        %1091 = vmatpush1.msra.mxu0 0.0
        %1092 = vmatprep.subr.mxu0 0.0
        %1093 = vmatpush1.msra.mxu0 0.0
        %1094 = vmatprep.subr.mxu0 0.0
        %1095 = vmatpush1.msra.mxu0 0.0
        %1096 = vmatprep.subr.mxu0 0.0
        %1097 = vmatpush1.msra.mxu0 0.0
        %1098 = vmatprep.subr.mxu0 0.0
        %1099 = vmatpush1.msra.mxu0 0.0
        %1100 = vmatprep.subr.mxu0 0.0
        %1101 = vmatpush1.msra.mxu0 %v190
        %1102 = vmatprep.subr.mxu0 0.0
        %1103 = vmatpush1.msra.mxu0 %v189
        %1104 = vmatprep.subr.mxu0 0.0
        %1105 = vmatpush2.msra.mxu0 0.0
        %1106 = vmatprep.subr.mxu0 0.0
        %1107 = vmatpush2.msra.mxu0 0.0
        %1108 = vmatprep.subr.mxu0 0.0
        %1109 = vmatpush2.msra.mxu0 0.0
        %1110 = vmatprep.subr.mxu0 0.0
        %1111 = vmatpush2.msra.mxu0 0.0
        %1112 = vmatprep.subr.mxu0 0.0
        %1113 = vmatpush2.msra.mxu0 0.0
        %1114 = vmatprep.subr.mxu0 0.0
        %1115 = vmatpush2.msra.mxu0 0.0
        %1116 = vmatprep.subr.mxu0 0.0
        %1117 = vmatpush2.msra.mxu0 0.0
        %1118 = vmatprep.subr.mxu0 0.0
        %1119 = vmatpush2.msra.mxu0 0.0
        %1120 = vmatprep.subr.mxu0 0.0
        %1121 = vmatpush2.msra.mxu0 0.0
        %1122 = vmatprep.subr.mxu0 0.0
        %1123 = vmatpush2.msra.mxu0 0.0
        %1124 = vmatprep.subr.mxu0 0.0
        %1125 = vmatpush2.msra.mxu0 0.0
        %1126 = vmatprep.subr.mxu0 0.0
        %1127 = vmatpush2.msra.mxu0 0.0
        %1128 = vmatprep.subr.mxu0 0.0
        %1129 = vmatpush2.msra.mxu0 0.0
        %1130 = vmatprep.subr.mxu0 0.0
        %1131 = vmatpush2.msra.mxu0 0.0
        %1132 = vmatprep.subr.mxu0 0.0
        %1133 = vmatpush2.msra.mxu0 0.0
        %1134 = vmatprep.subr.mxu0 0.0
        %1135 = vmatpush2.msra.mxu0 0.0
        %1136 = vmatprep.mubr.f32.mxu0 0.0
        %1137 = vmatmul.mubr.f32.gmra.mxu0 %v1031
        %v1138 = vpop.f32.mrf.mxu0
        %v1139 = vadd.f32 0.0, %v1138
        %v1140 = vpop.f32.mrf.mxu0
        %1141 = vmatprep.mubr.f32.mxu0 0.0
        %1142 = vmatmul.mubr.f32.gmra.mxu0 %v1034
        %v1143 = vpop.f32.mrf.mxu0
        %v1144 = vadd.f32 0.0, %v1143
        %v1145 = vpop.f32.mrf.mxu0
        %1146 = vmatprep.mubr.f32.mxu0 0.0
        %1147 = vmatmul.mubr.f32.gmra.mxu0 %v1037
        %v1148 = vpop.f32.mrf.mxu0
        %v1149 = vadd.f32 0.0, %v1148
        %v1150 = vpop.f32.mrf.mxu0
        %1151 = vmatprep.mubr.f32.mxu0 0.0
        %1152 = vmatmul.mubr.f32.gmra.mxu0 %v1040
        %v1153 = vpop.f32.mrf.mxu0
        %v1154 = vadd.f32 0.0, %v1153
        %v1155 = vpop.f32.mrf.mxu0
        %1156 = vmatprep.mubr.f32.mxu0 0.0
        %1157 = vmatmul.mubr.f32.gmra.mxu0 %v1043
        %v1158 = vpop.f32.mrf.mxu0
        %v1159 = vadd.f32 0.0, %v1158
        %v1160 = vpop.f32.mrf.mxu0
        %1161 = vmatprep.mubr.f32.mxu0 0.0
        %1162 = vmatmul.mubr.f32.gmra.mxu0 %v1046
        %v1163 = vpop.f32.mrf.mxu0
        %v1164 = vadd.f32 0.0, %v1163
        %v1165 = vpop.f32.mrf.mxu0
        %1166 = vmatprep.mubr.f32.mxu0 0.0
        %1167 = vmatmul.mubr.f32.gmra.mxu0 %v1049
        %v1168 = vpop.f32.mrf.mxu0
        %v1169 = vadd.f32 0.0, %v1168
        %v1170 = vpop.f32.mrf.mxu0
        %1171 = vmatprep.mubr.f32.mxu0 0.0
        %1172 = vmatmul.mubr.f32.gmra.mxu0 %v1052
        %v1173 = vpop.f32.mrf.mxu0
        %v1174 = vadd.f32 0.0, %v1173
        %v1175 = vpop.f32.mrf.mxu0
        %1176 = vmatprep.mubr.f32.mxu0 0.0
        %1177 = vmatmul.mubr.f32.gmra.mxu0 %v1055
        %v1178 = vpop.f32.mrf.mxu0
        %v1179 = vadd.f32 0.0, %v1178
        %v1180 = vpop.f32.mrf.mxu0
        %1181 = vmatprep.mubr.f32.mxu0 0.0
        %1182 = vmatmul.mubr.f32.gmra.mxu0 %v1058
        %v1183 = vpop.f32.mrf.mxu0
        %v1184 = vadd.f32 0.0, %v1183
        %v1185 = vpop.f32.mrf.mxu0
        %1186 = vmatprep.mubr.f32.mxu0 0.0
        %1187 = vmatmul.mubr.f32.gmra.mxu0 %v1061
        %v1188 = vpop.f32.mrf.mxu0
        %v1189 = vadd.f32 0.0, %v1188
        %v1190 = vpop.f32.mrf.mxu0
        %1191 = vmatprep.mubr.f32.mxu0 0.0
        %1192 = vmatmul.mubr.f32.gmra.mxu0 %v1064
        %v1193 = vpop.f32.mrf.mxu0
        %v1194 = vadd.f32 0.0, %v1193
        %v1195 = vpop.f32.mrf.mxu0
        %1196 = vmatprep.mubr.f32.mxu0 0.0
        %1197 = vmatmul.mubr.f32.gmra.mxu0 %v1067
        %v1198 = vpop.f32.mrf.mxu0
        %v1199 = vadd.f32 0.0, %v1198
        %v1200 = vpop.f32.mrf.mxu0
        %1201 = vmatprep.mubr.f32.mxu0 0.0
        %1202 = vmatmul.mubr.f32.gmra.mxu0 %v1070
        %v1203 = vpop.f32.mrf.mxu0
        %v1204 = vadd.f32 0.0, %v1203
        %v1205 = vpop.f32.mrf.mxu0
        %1206 = vdwg.mxu0
        %s1207 = scalar_lea.vmem %s166, 224 [#allocation2]
        %1208 = vst [vmem:[%s1207] sm:$0xff] %v1139
        %1209 = vst [vmem:[%s1207 + $0x8] sm:$0xff] %v1144
        %1210 = vst [vmem:[%s1207 + $0x10] sm:$0xff] %v1149
        %1211 = vst [vmem:[%s1207 + $0x18] sm:$0xff] %v1154
        %1212 = vst [vmem:[%s1207 + $0x20] sm:$0xff] %v1159
        %1213 = vst [vmem:[%s1207 + $0x28] sm:$0xff] %v1164
        %1214 = vst [vmem:[%s1207 + $0x30] sm:$0xff] %v1169
        %1215 = vst [vmem:[%s1207 + $0x38] sm:$0xff] %v1174
        %1216 = vst [vmem:[%s1207 + $0x40] sm:$0xff] %v1179
        %1217 = vst [vmem:[%s1207 + $0x48] sm:$0xff] %v1184
        %1218 = vst [vmem:[%s1207 + $0x50] sm:$0xff] %v1189
        %1219 = vst [vmem:[%s1207 + $0x58] sm:$0xff] %v1194
        %1220 = vst [vmem:[%s1207 + $0x60] sm:$0xff] %v1199
        %1221 = vst [vmem:[%s1207 + $0x68] sm:$0xff] %v1204
        %s1222 = sand.u32 %s93, 1
        %s1223 = scalar_lea.sflag [#allocation3], %s1222
        %s1224 = sand.u32 %s93, 1
        %s1225 = smul.addr %s1224, 336
        %s1226 = scalar_lea.vmem [#allocation2], %s1225
        // Predicated region
        $region33: #{tpu_custom_call.1} parent=31 // pred_check
          %p1227 = pneg %p103
        $region34: #{tpu_custom_call.1} parent=31 // pred_check_branch
          %1229 = sbr.rel (%p1227) target = $region36
        $region35: #{tpu_custom_call.1} parent=31 // pred_region
          %s1230 = smul.u32 3, %s17
          %s1232 = ssub.s32 5376, 5376
          %1233 = vsyncadd %s1223, %s1232
          %s1234 = smul.addr %s1230, 14
          %s1235 = smul.addr %s1234, 128
          %s1236 = scalar_lea.hbm %s3, %s1235
          %s1237 = sshll.u32 %s1226, 4
          %s1238 = int_to_ptr.vmem [resolvable:$true] %s1237
          %1243 = dma.vmem_to_hbm [thread:$0]  %s1238, 5376, %s1236, %s1223, 128, 128, 8
        $region36: #{tpu_custom_call.1} parent=31 // pred_fallthru
          _
      $region32: #{tpu_custom_call.1} parent=5 // pred_fallthru
        _
      %p1244 = scmp.le.s32.totalorder 2, %s12
      // Predicated region
      $region37: #{tpu_custom_call.1} parent=5 // pred_check
        %p1245 = pneg %p1244
      $region38: #{tpu_custom_call.1} parent=5 // pred_check_branch
        %1247 = sbr.rel (%p1245) target = $region40
      $region39: #{tpu_custom_call.1} parent=5 // pred_region
        %s1248 = ssub.s32 %s12, 2
        // Predicated region
        $region41: #{tpu_custom_call.1} parent=39 // pred_check
          %p1249 = pneg %p109
        $region42: #{tpu_custom_call.1} parent=39 // pred_check_branch
          %1251 = sbr.rel (%p1249) target = $region44
        $region43: #{tpu_custom_call.1} parent=39 // pred_region
          %s1252 = sand.u32 %s94, 1
          %s1253 = scalar_lea.sflag [#allocation3], %s1252
          %s1254 = sand.u32 %s94, 1
          %s1255 = smul.addr %s1254, 336
          %s1256 = scalar_lea.vmem [#allocation2], %s1255
          %1257 = dma.done %s1253, 5376
        $region44: #{tpu_custom_call.1} parent=39 // pred_fallthru
          _
      $region40: #{tpu_custom_call.1} parent=5 // pred_fallthru
        _
    $region6: #{tpu_custom_call.1} parent=1 // loop_footer
      %s16 = sadd.s32 1, %s12
    $region7: #{tpu_custom_call.1} parent=1 // loop_footer_branch
      %11 = sbr.rel target = $region3
    $region8: #{tpu_custom_call.1} parent=1 // loop_exit
      _
    %1258 = vsyncpa [#allocation3], 1
    %s1259 = scalar_lea.sflag [#allocation3], 1
    %1260 = vsyncpa %s1259, 1

</llo_original>
